<compile_context>
chip_gen: v7x
topology: tpu7x:2x2x1
jax: 0.10.0
libtpu: 0.0.40
codegen_flags: <defaults>
</compile_context>

<pallas_src>
import jax
import jax.numpy as jnp
from jax.experimental import pallas as pl
from jax.experimental.pallas import tpu as pltpu


KV_TILE_TARGET = 256   # matches v6e/v7x 256x256 MXU; still a multiple of v5e's 128
F_TILE_TARGET = 512


def _pick_tile(dim, target):
    """Largest tile <= target that divides dim (static, trace-time)."""
    t = min(dim, target)
    while dim % t:
        t -= 1
    return t


def _pick_batch_tile(B, S):
    """Fold batch elements into the matmul M dim when S is small; Bt divides B."""
    target_rows = 256
    bt = 1
    for cand in range(1, B + 1):
        if B % cand == 0 and cand * S <= target_rows:
            bt = cand
    return bt


def _vmem_limit_bytes(Bt, S, H, F, kv_tile, f_tile):
    """Weights (single-buffered) + double-buffered streams + live activations."""
    weights = (3 * H * H + H * H + 2 * H * F) * 2 + (5 * H + F) * 4   # bf16 mats + f32 vecs
    streams = 2 * (Bt * S * H * 2 + 2 * Bt * S * 4 + Bt * H * 4)      # emb/bias/pool/out x2 bufs
    acts = Bt * S * (3 * H * 2 + 4 * (5 * H + f_tile + kv_tile))      # qkv bf16 + f32 work set
    budget = weights + streams + acts + 4 * 2**20                      # headroom
    return int(min(64 * 2**20, max(32 * 2**20, budget)))


# ----------------------------- Pallas kernel ---------------------------------

def _layer_norm_fused(x, g, b, eps=1e-12):
    """One-pass LN: sum and sum-of-squares in a single reduction region."""
    n = x.shape[-1]
    s1 = jnp.sum(x, axis=-1, keepdims=True)
    s2 = jnp.sum(x * x, axis=-1, keepdims=True)
    mu = s1 * (1.0 / n)
    var = s2 * (1.0 / n) - mu * mu
    return (x - mu) * jax.lax.rsqrt(var + eps) * g + b


def apollo_kernel(emb_ref, key_bias_ref, pool_w_ref,
                  wqkv_ref, wo_ref,
                  ln1g_ref, ln1b_ref,
                  w1_ref, b1_ref, w2_ref, b2_ref,
                  ln2g_ref, ln2b_ref,
                  pooled_ref):
    """One grid step = Bt batch elements (M = Bt*S rows for the big GEMMs).

    emb_ref      : [Bt*S, H]  bf16  token embeddings (batch folded into M)
    key_bias_ref : [Bt, 1, S] f32   (1-mask)*-1e9 additive key bias
    pool_w_ref   : [Bt, 1, S] f32   mask / clamp(sum(mask), 1e-9)
    wqkv_ref     : [H, 3H]    bf16  (Q columns pre-scaled by 1/sqrt(H))
    wo/w1/w2     : bf16 weights ;  ln*/b*  : f32
    pooled_ref   : [Bt, 1, H] f32   masked-mean-pooled hidden states
    """
    M, H = emb_ref.shape
    Bt, _, S = key_bias_ref.shape
    F = w1_ref.shape[1]
    kv_tile = _pick_tile(S, KV_TILE_TARGET)
    f_tile = _pick_tile(F, F_TILE_TARGET)

    x_bf = emb_ref[...]                              # [M, H] bf16
    x_f32 = x_bf.astype(jnp.float32)                 # residual / LN path

    # ---- fused QKV projection: one MXU pass, one bf16 copy kept live ----
    qkv = jnp.dot(x_bf, wqkv_ref[...],
                  preferred_element_type=jnp.float32).astype(jnp.bfloat16)  # [M, 3H]

    # ---- attention: per-batch flash-style online softmax over KV tiles ----
    attn_rows = []
    for b in range(Bt):                              # static; Bt==1 at BERT sizes
        q = qkv[b * S:(b + 1) * S, 0:H]
        k = qkv[b * S:(b + 1) * S, H:2 * H]
        v = qkv[b * S:(b + 1) * S, 2 * H:3 * H]
        kb = key_bias_ref[b]                         # [1, S] f32
        m_i = jnp.full((S, 1), -jnp.inf, jnp.float32)
        l_i = jnp.zeros((S, 1), jnp.float32)
        acc = jnp.zeros((S, H), jnp.float32)
        for t in range(S // kv_tile):                # static KV-tile loop
            lo = t * kv_tile
            s_t = jax.lax.dot_general(
                q, k[lo:lo + kv_tile, :], (((1,), (1,)), ((), ())),
                preferred_element_type=jnp.float32)  # [S, kv_tile]
            s_t = s_t + kb[:, lo:lo + kv_tile]       # mask padded keys
            m_new = jnp.maximum(m_i, jnp.max(s_t, axis=-1, keepdims=True))
            alpha = jnp.exp(m_i - m_new)
            p = jnp.exp(s_t - m_new)
            l_i = alpha * l_i + jnp.sum(p, axis=-1, keepdims=True)
            acc = alpha * acc + jnp.dot(p.astype(jnp.bfloat16),
                                        v[lo:lo + kv_tile, :],
                                        preferred_element_type=jnp.float32)
            m_i = m_new
        attn_rows.append(acc * pl.reciprocal(l_i, approx=True))   # EUP divide
    attn = attn_rows[0] if Bt == 1 else jnp.concatenate(attn_rows, axis=0)  # [M, H]

    ao = jnp.dot(attn.astype(jnp.bfloat16), wo_ref[...],
                 preferred_element_type=jnp.float32)              # [M, H]
    h1 = _layer_norm_fused(x_f32 + ao, ln1g_ref[...], ln1b_ref[...])

    # ---- FFN, blocked over F: no full [M, F] intermediate ever lives ----
    h1_bf = h1.astype(jnp.bfloat16)
    ff = jnp.zeros((M, H), jnp.float32)
    for t in range(F // f_tile):                     # static F-tile loop
        lo = t * f_tile
        g_t = jnp.dot(h1_bf, w1_ref[:, lo:lo + f_tile],
                      preferred_element_type=jnp.float32) + b1_ref[:, lo:lo + f_tile]
        g_t = jax.nn.gelu(g_t, approximate=True)
        ff = ff + jnp.dot(g_t.astype(jnp.bfloat16), w2_ref[lo:lo + f_tile, :],
                          preferred_element_type=jnp.float32)
    h2 = _layer_norm_fused(h1 + ff + b2_ref[...], ln2g_ref[...], ln2b_ref[...])  # [M, H]

    # ---- masked mean pooling as a matmul: [1,S] @ [S,H] per batch row ----
    for b in range(Bt):
        pooled_ref[b] = jnp.dot(pool_w_ref[b], h2[b * S:(b + 1) * S, :],
                                preferred_element_type=jnp.float32)   # [1, H]


# ----------------------------- wrapper ----------------------------------------

def apollo_forward(emb, mask, params, n_classes=2):
    """emb: [B,S,H] f32 token embeddings, mask: [B,S] int32. Returns [B,2] f32."""
    B, S, H = emb.shape
    F = params['w1'].shape[1]
    Bt = _pick_batch_tile(B, S)
    kv_tile = _pick_tile(S, KV_TILE_TARGET)
    f_tile = _pick_tile(F, F_TILE_TARGET)

    # Mask-derived tensors precomputed outside the kernel (cheap XLA ops).
    maskf = mask.astype(jnp.float32)
    key_bias = ((1.0 - maskf) * (-1e9))[:, None, :]                     # [B,1,S]
    lengths = jnp.maximum(jnp.sum(maskf, axis=1, keepdims=True), 1e-9)  # [B,1]
    pool_w = (maskf / lengths)[:, None, :]                              # [B,1,S]
    emb2d = emb.astype(jnp.bfloat16).reshape(B * S, H)                  # bf16 DMA stream

    inputs = (emb2d, key_bias, pool_w,
              params['wqkv'], params['wo'],
              params['ln1_g'], params['ln1_b'],
              params['w1'], params['b1'], params['w2'], params['b2'],
              params['ln2_g'], params['ln2_b'])

    def resident(shape):
        # Grid-invariant parameter: constant index map (no per-step re-DMA) and
        # a single buffer (no double-buffering of ~weights-sized constants).
        nd = len(shape)
        return pl.BlockSpec(shape, lambda b, _nd=nd: (0,) * _nd,
                            pipeline_mode=pl.Buffered(1))

    in_specs = [
        pl.BlockSpec((Bt * S, H), lambda b: (b, 0)),    # emb      (per-step stream)
        pl.BlockSpec((Bt, 1, S), lambda b: (b, 0, 0)),  # key_bias (per-step stream)
        pl.BlockSpec((Bt, 1, S), lambda b: (b, 0, 0)),  # pool_w   (per-step stream)
        resident((H, 3 * H)),                           # wqkv
        resident((H, H)),                               # wo
        resident((1, H)), resident((1, H)),             # ln1
        resident((H, F)), resident((1, F)),             # w1, b1
        resident((F, H)), resident((1, H)),             # w2, b2
        resident((1, H)), resident((1, H)),             # ln2
    ]
    out_spec = pl.BlockSpec((Bt, 1, H), lambda b: (b, 0, 0))

    pooled = pl.pallas_call(
        apollo_kernel,
        out_shape=jax.ShapeDtypeStruct((B, 1, H), jnp.float32),
        grid=(B // Bt,),
        in_specs=in_specs,
        out_specs=out_spec,
        compiler_params=pltpu.CompilerParams(
            dimension_semantics=("parallel",),
            vmem_limit_bytes=_vmem_limit_bytes(Bt, S, H, F, kv_tile, f_tile)),
    )(*inputs)

    # Linear(H, n_classes) epilogue in XLA: the 2-class GEMV is noise and would
    # waste 126/128 MXU lanes inside the kernel.
    return pooled[:, 0, :] @ params['fc_w'].T + params['fc_b']


# ----------------------------- pure-JAX reference ----------------------------

def _layer_norm_ref(x, g, b, eps=1e-12):
    mu = jnp.mean(x, axis=-1, keepdims=True)
    var = jnp.mean((x - mu) ** 2, axis=-1, keepdims=True)
    return (x - mu) * jax.lax.rsqrt(var + eps) * g + b


def apollo_reference(emb, mask, params, n_classes=2):
    B, S, H = emb.shape
    bf = jnp.bfloat16
    maskf = mask.astype(jnp.float32)
    x = emb.astype(bf)                      # kernel consumes bf16 embeddings
    xf = x.astype(jnp.float32)

    qkv = jnp.einsum('bsh,hd->bsd', x, params['wqkv'],
                     preferred_element_type=jnp.float32).astype(bf)
    q, k, v = qkv[..., :H], qkv[..., H:2 * H], qkv[..., 2 * H:]
    s = jnp.einsum('bqd,bkd->bqk', q, k, preferred_element_type=jnp.float32)
    s = s + ((1.0 - maskf) * (-1e9))[:, None, :]
    p = jax.nn.softmax(s, axis=-1)
    attn = jnp.einsum('bqk,bkd->bqd', p.astype(bf), v,
                      preferred_element_type=jnp.float32)
    ao = jnp.einsum('bsh,hd->bsd', attn.astype(bf), params['wo'],
                    preferred_element_type=jnp.float32)
    h1 = _layer_norm_ref(xf + ao, params['ln1_g'], params['ln1_b'])
    ff = jnp.einsum('bsh,hf->bsf', h1.astype(bf), params['w1'],
                    preferred_element_type=jnp.float32) + params['b1']
    ff = jax.nn.gelu(ff, approximate=True)
    ff = jnp.einsum('bsf,fh->bsh', ff.astype(bf), params['w2'],
                    preferred_element_type=jnp.float32) + params['b2']
    h2 = _layer_norm_ref(h1 + ff, params['ln2_g'], params['ln2_b'])

    lengths = jnp.maximum(jnp.sum(maskf, axis=1, keepdims=True), 1e-9)
    pooled = jnp.einsum('bs,bsh->bh', maskf / lengths, h2)
    return pooled @ params['fc_w'].T + params['fc_b']


# ----------------------------- parameter init --------------------------------

def init_params(key, vocab, hidden, n_classes):
    ks = jax.random.split(key, 8)
    H, F = hidden, 4 * hidden
    std = 0.02

    wq = std * jax.random.normal(ks[1], (H, H), jnp.float32)
    wk = std * jax.random.normal(ks[2], (H, H), jnp.float32)
    wv = std * jax.random.normal(ks[3], (H, H), jnp.float32)
    # Fold the 1/sqrt(H) attention-score scale into the Q columns and fuse QKV.
    wqkv = jnp.concatenate([wq * (float(H) ** -0.5), wk, wv], axis=1)

    # fc: nn.Linear(H, 2), xavier_normal_ weight / zero bias (per _init_params).
    xavier_std = (2.0 / (H + n_classes)) ** 0.5
    return {
        'emb_table': std * jax.random.normal(ks[0], (vocab, H), jnp.float32),
        'wqkv': wqkv.astype(jnp.bfloat16),                               # [H, 3H]
        'wo': (std * jax.random.normal(ks[4], (H, H), jnp.float32)
               ).astype(jnp.bfloat16),
        'ln1_g': jnp.ones((1, H), jnp.float32),
        'ln1_b': jnp.zeros((1, H), jnp.float32),
        'w1': (std * jax.random.normal(ks[5], (H, F), jnp.float32)
               ).astype(jnp.bfloat16),
        'b1': jnp.zeros((1, F), jnp.float32),
        'w2': (std * jax.random.normal(ks[6], (F, H), jnp.float32)
               ).astype(jnp.bfloat16),
        'b2': jnp.zeros((1, H), jnp.float32),
        'ln2_g': jnp.ones((1, H), jnp.float32),
        'ln2_b': jnp.zeros((1, H), jnp.float32),
        'fc_w': xavier_std * jax.random.normal(ks[7], (n_classes, H), jnp.float32),
        'fc_b': jnp.zeros((n_classes,), jnp.float32),
    }


# ----------------------------- main -------------------------------------------

if __name__ == "__main__":
    B, S, H, V, C = 2, 8, 32, 100, 2

    key = jax.random.PRNGKey(0)
    k_param, k_ids = jax.random.split(key)
    params = init_params(k_param, V, H, C)

    input_ids = jax.random.randint(k_ids, (B, S), 0, V, dtype=jnp.int32)
    lengths = jnp.array([S, 5], dtype=jnp.int32)
    attention_mask = (jnp.arange(S, dtype=jnp.int32)[None, :]
                      < lengths[:, None]).astype(jnp.int32)

    # Embedding lookup (glue, plain JAX gather) -> token embeddings for the kernel.
    emb = jnp.take(params['emb_table'], input_ids, axis=0)      # [B, S, H] f32

    out = apollo_forward(emb, attention_mask, params, n_classes=C)
    out = jax.block_until_ready(out)

    ref = apollo_reference(emb, attention_mask, params, n_classes=C)
    assert out.shape == (B, C)
    assert jnp.allclose(out, ref, rtol=2e-2, atol=2e-2), (out, ref)

    print("KERNEL_OK")
</pallas_src>

<mosaic_0001>
module attributes {stable_mosaic.version = 11 : i64} {
  func.func @apollo_kernel(%arg0: i32, %arg1: memref<16x32xbf16, #tpu.memory_space<vmem>>, %arg2: memref<2x1x8xf32, #tpu.memory_space<vmem>>, %arg3: memref<2x1x8xf32, #tpu.memory_space<vmem>>, %arg4: memref<32x96xbf16, #tpu.memory_space<vmem>>, %arg5: memref<32x32xbf16, #tpu.memory_space<vmem>>, %arg6: memref<1x32xf32, #tpu.memory_space<vmem>>, %arg7: memref<1x32xf32, #tpu.memory_space<vmem>>, %arg8: memref<32x128xbf16, #tpu.memory_space<vmem>>, %arg9: memref<1x128xf32, #tpu.memory_space<vmem>>, %arg10: memref<128x32xbf16, #tpu.memory_space<vmem>>, %arg11: memref<1x32xf32, #tpu.memory_space<vmem>>, %arg12: memref<1x32xf32, #tpu.memory_space<vmem>>, %arg13: memref<1x32xf32, #tpu.memory_space<vmem>>, %arg14: memref<2x1x32xf32, #tpu.memory_space<vmem>>) attributes {dimension_semantics = [#tpu.dimension_semantics<parallel>], iteration_bounds = array<i64: 1>, scalar_prefetch = 0 : i64, scratch_operands = 0 : i64, tpu.core_type = #tpu.core_type<tc>, window_params = [{transform_indices = @transform_0, window_bounds = array<i64: 16, 32>}, {transform_indices = @transform_1, window_bounds = array<i64: 2, 1, 8>}, {transform_indices = @transform_2, window_bounds = array<i64: 2, 1, 8>}, {pipeline_mode = #tpu.pipeline_mode<synchronous>, transform_indices = @transform_3, window_bounds = array<i64: 32, 96>}, {pipeline_mode = #tpu.pipeline_mode<synchronous>, transform_indices = @transform_4, window_bounds = array<i64: 32, 32>}, {pipeline_mode = #tpu.pipeline_mode<synchronous>, transform_indices = @transform_5, window_bounds = array<i64: 1, 32>}, {pipeline_mode = #tpu.pipeline_mode<synchronous>, transform_indices = @transform_6, window_bounds = array<i64: 1, 32>}, {pipeline_mode = #tpu.pipeline_mode<synchronous>, transform_indices = @transform_7, window_bounds = array<i64: 32, 128>}, {pipeline_mode = #tpu.pipeline_mode<synchronous>, transform_indices = @transform_8, window_bounds = array<i64: 1, 128>}, {pipeline_mode = #tpu.pipeline_mode<synchronous>, transform_indices = @transform_9, window_bounds = array<i64: 128, 32>}, {pipeline_mode = #tpu.pipeline_mode<synchronous>, transform_indices = @transform_10, window_bounds = array<i64: 1, 32>}, {pipeline_mode = #tpu.pipeline_mode<synchronous>, transform_indices = @transform_11, window_bounds = array<i64: 1, 32>}, {pipeline_mode = #tpu.pipeline_mode<synchronous>, transform_indices = @transform_12, window_bounds = array<i64: 1, 32>}, {transform_indices = @transform_13, window_bounds = array<i64: 2, 1, 32>}]} {
    %c0 = arith.constant 0 : index
    %c0_0 = arith.constant 0 : index
    %0 = vector.load %arg1[%c0, %c0_0] : memref<16x32xbf16, #tpu.memory_space<vmem>>, vector<16x32xbf16>
    %1 = arith.extf %0 : vector<16x32xbf16> to vector<16x32xf32>
    %c0_1 = arith.constant 0 : index
    %c0_2 = arith.constant 0 : index
    %2 = vector.load %arg4[%c0_1, %c0_2] : memref<32x96xbf16, #tpu.memory_space<vmem>>, vector<32x96xbf16>
    %cst = arith.constant dense<0.000000e+00> : vector<16x96xf32>
    %3 = tpu.matmul %0, %2, %cst {dimension_numbers = #tpu.dot_dimension_numbers<[1], [0], [0], [1], [0, 0, 1, 1], [], []>} : vector<16x32xbf16>, vector<32x96xbf16>, vector<16x96xf32> -> vector<16x96xf32>
    %4 = arith.truncf %3 : vector<16x96xf32> to vector<16x96xbf16>
    %5 = vector.extract_strided_slice %4 {offsets = [0, 0], sizes = [8, 32], strides = [1, 1]} : vector<16x96xbf16> to vector<8x32xbf16>
    %6 = vector.extract_strided_slice %4 {offsets = [0, 32], sizes = [8, 32], strides = [1, 1]} : vector<16x96xbf16> to vector<8x32xbf16>
    %7 = vector.extract_strided_slice %4 {offsets = [0, 64], sizes = [8, 32], strides = [1, 1]} : vector<16x96xbf16> to vector<8x32xbf16>
    %c0_3 = arith.constant 0 : index
    %c0_4 = arith.constant 0 : index
    %c0_5 = arith.constant 0 : index
    %8 = vector.load %arg2[%c0_3, %c0_4, %c0_5] : memref<2x1x8xf32, #tpu.memory_space<vmem>>, vector<1x1x8xf32>
    %9 = vector.shape_cast %8 : vector<1x1x8xf32> to vector<1x8xf32>
    %cst_6 = arith.constant 0xFF800000 : f32
    %10 = vector.broadcast %cst_6 : f32 to vector<8x1xf32>
    %cst_7 = arith.constant 0.000000e+00 : f32
    %11 = vector.broadcast %cst_7 : f32 to vector<8x1xf32>
    %cst_8 = arith.constant 0.000000e+00 : f32
    %12 = vector.broadcast %cst_8 : f32 to vector<8x32xf32>
    %cst_9 = arith.constant dense<0.000000e+00> : vector<8x8xf32>
    %13 = tpu.matmul %5, %6, %cst_9 {dimension_numbers = #tpu.dot_dimension_numbers<[1], [1], [0], [0], [0, 0, 1, 0], [], []>} : vector<8x32xbf16>, vector<8x32xbf16>, vector<8x8xf32> -> vector<8x8xf32>
    %14 = vector.broadcast %9 : vector<1x8xf32> to vector<8x8xf32>
    %15 = arith.addf %13, %14 : vector<8x8xf32>
    %cst_10 = arith.constant dense<0xFF800000> : vector<8xf32>
    %16 = vector.multi_reduction <maximumf>, %15, %cst_10 [1] : vector<8x8xf32> to vector<8xf32>
    %17 = vector.shape_cast %16 : vector<8xf32> to vector<8x1xf32>
    %18 = arith.maximumf %10, %17 : vector<8x1xf32>
    %19 = arith.subf %10, %18 : vector<8x1xf32>
    %20 = math.exp %19 : vector<8x1xf32>
    %21 = vector.broadcast %18 : vector<8x1xf32> to vector<8x8xf32>
    %22 = arith.subf %15, %21 : vector<8x8xf32>
    %23 = math.exp %22 : vector<8x8xf32>
    %24 = arith.mulf %20, %11 : vector<8x1xf32>
    %cst_11 = arith.constant dense<0.000000e+00> : vector<8xf32>
    %25 = vector.multi_reduction <add>, %23, %cst_11 [1] : vector<8x8xf32> to vector<8xf32>
    %26 = vector.shape_cast %25 : vector<8xf32> to vector<8x1xf32>
    %27 = arith.addf %24, %26 : vector<8x1xf32>
    %28 = vector.broadcast %20 : vector<8x1xf32> to vector<8x32xf32>
    %29 = arith.mulf %28, %12 : vector<8x32xf32>
    %30 = arith.truncf %23 : vector<8x8xf32> to vector<8x8xbf16>
    %cst_12 = arith.constant dense<0.000000e+00> : vector<8x32xf32>
    %31 = tpu.matmul %30, %7, %cst_12 {dimension_numbers = #tpu.dot_dimension_numbers<[1], [0], [0], [1], [0, 0, 1, 1], [], []>} : vector<8x8xbf16>, vector<8x32xbf16>, vector<8x32xf32> -> vector<8x32xf32>
    %32 = arith.addf %29, %31 : vector<8x32xf32>
    %33 = tpu.reciprocal %27 {approx = true} : vector<8x1xf32> -> vector<8x1xf32>
    %34 = vector.broadcast %33 : vector<8x1xf32> to vector<8x32xf32>
    %35 = arith.mulf %32, %34 : vector<8x32xf32>
    %36 = vector.extract_strided_slice %4 {offsets = [8, 0], sizes = [8, 32], strides = [1, 1]} : vector<16x96xbf16> to vector<8x32xbf16>
    %37 = vector.extract_strided_slice %4 {offsets = [8, 32], sizes = [8, 32], strides = [1, 1]} : vector<16x96xbf16> to vector<8x32xbf16>
    %38 = vector.extract_strided_slice %4 {offsets = [8, 64], sizes = [8, 32], strides = [1, 1]} : vector<16x96xbf16> to vector<8x32xbf16>
    %c1 = arith.constant 1 : index
    %c0_13 = arith.constant 0 : index
    %c0_14 = arith.constant 0 : index
    %39 = vector.load %arg2[%c1, %c0_13, %c0_14] : memref<2x1x8xf32, #tpu.memory_space<vmem>>, vector<1x1x8xf32>
    %40 = vector.shape_cast %39 : vector<1x1x8xf32> to vector<1x8xf32>
    %cst_15 = arith.constant 0xFF800000 : f32
    %41 = vector.broadcast %cst_15 : f32 to vector<8x1xf32>
    %cst_16 = arith.constant 0.000000e+00 : f32
    %42 = vector.broadcast %cst_16 : f32 to vector<8x1xf32>
    %cst_17 = arith.constant 0.000000e+00 : f32
    %43 = vector.broadcast %cst_17 : f32 to vector<8x32xf32>
    %cst_18 = arith.constant dense<0.000000e+00> : vector<8x8xf32>
    %44 = tpu.matmul %36, %37, %cst_18 {dimension_numbers = #tpu.dot_dimension_numbers<[1], [1], [0], [0], [0, 0, 1, 0], [], []>} : vector<8x32xbf16>, vector<8x32xbf16>, vector<8x8xf32> -> vector<8x8xf32>
    %45 = vector.broadcast %40 : vector<1x8xf32> to vector<8x8xf32>
    %46 = arith.addf %44, %45 : vector<8x8xf32>
    %cst_19 = arith.constant dense<0xFF800000> : vector<8xf32>
    %47 = vector.multi_reduction <maximumf>, %46, %cst_19 [1] : vector<8x8xf32> to vector<8xf32>
    %48 = vector.shape_cast %47 : vector<8xf32> to vector<8x1xf32>
    %49 = arith.maximumf %41, %48 : vector<8x1xf32>
    %50 = arith.subf %41, %49 : vector<8x1xf32>
    %51 = math.exp %50 : vector<8x1xf32>
    %52 = vector.broadcast %49 : vector<8x1xf32> to vector<8x8xf32>
    %53 = arith.subf %46, %52 : vector<8x8xf32>
    %54 = math.exp %53 : vector<8x8xf32>
    %55 = arith.mulf %51, %42 : vector<8x1xf32>
    %cst_20 = arith.constant dense<0.000000e+00> : vector<8xf32>
    %56 = vector.multi_reduction <add>, %54, %cst_20 [1] : vector<8x8xf32> to vector<8xf32>
    %57 = vector.shape_cast %56 : vector<8xf32> to vector<8x1xf32>
    %58 = arith.addf %55, %57 : vector<8x1xf32>
    %59 = vector.broadcast %51 : vector<8x1xf32> to vector<8x32xf32>
    %60 = arith.mulf %59, %43 : vector<8x32xf32>
    %61 = arith.truncf %54 : vector<8x8xf32> to vector<8x8xbf16>
    %cst_21 = arith.constant dense<0.000000e+00> : vector<8x32xf32>
    %62 = tpu.matmul %61, %38, %cst_21 {dimension_numbers = #tpu.dot_dimension_numbers<[1], [0], [0], [1], [0, 0, 1, 1], [], []>} : vector<8x8xbf16>, vector<8x32xbf16>, vector<8x32xf32> -> vector<8x32xf32>
    %63 = arith.addf %60, %62 : vector<8x32xf32>
    %64 = tpu.reciprocal %58 {approx = true} : vector<8x1xf32> -> vector<8x1xf32>
    %65 = vector.broadcast %64 : vector<8x1xf32> to vector<8x32xf32>
    %66 = arith.mulf %63, %65 : vector<8x32xf32>
    %67 = tpu.concatenate %35, %66 in 0 : vector<8x32xf32>, vector<8x32xf32> -> vector<16x32xf32>
    %68 = arith.truncf %67 : vector<16x32xf32> to vector<16x32xbf16>
    %c0_22 = arith.constant 0 : index
    %c0_23 = arith.constant 0 : index
    %69 = vector.load %arg5[%c0_22, %c0_23] : memref<32x32xbf16, #tpu.memory_space<vmem>>, vector<32x32xbf16>
    %cst_24 = arith.constant dense<0.000000e+00> : vector<16x32xf32>
    %70 = tpu.matmul %68, %69, %cst_24 {dimension_numbers = #tpu.dot_dimension_numbers<[1], [0], [0], [1], [0, 0, 1, 1], [], []>} : vector<16x32xbf16>, vector<32x32xbf16>, vector<16x32xf32> -> vector<16x32xf32>
    %71 = arith.addf %1, %70 : vector<16x32xf32>
    %c0_25 = arith.constant 0 : index
    %c0_26 = arith.constant 0 : index
    %72 = vector.load %arg6[%c0_25, %c0_26] : memref<1x32xf32, #tpu.memory_space<vmem>>, vector<1x32xf32>
    %c0_27 = arith.constant 0 : index
    %c0_28 = arith.constant 0 : index
    %73 = vector.load %arg7[%c0_27, %c0_28] : memref<1x32xf32, #tpu.memory_space<vmem>>, vector<1x32xf32>
    %cst_29 = arith.constant dense<0.000000e+00> : vector<16xf32>
    %74 = vector.multi_reduction <add>, %71, %cst_29 [1] : vector<16x32xf32> to vector<16xf32>
    %75 = vector.shape_cast %74 : vector<16xf32> to vector<16x1xf32>
    %76 = arith.mulf %71, %71 : vector<16x32xf32>
    %cst_30 = arith.constant dense<0.000000e+00> : vector<16xf32>
    %77 = vector.multi_reduction <add>, %76, %cst_30 [1] : vector<16x32xf32> to vector<16xf32>
    %78 = vector.shape_cast %77 : vector<16xf32> to vector<16x1xf32>
    %cst_31 = arith.constant 3.125000e-02 : f32
    %79 = vector.broadcast %cst_31 : f32 to vector<16x1xf32>
    %80 = arith.mulf %75, %79 : vector<16x1xf32>
    %cst_32 = arith.constant 3.125000e-02 : f32
    %81 = vector.broadcast %cst_32 : f32 to vector<16x1xf32>
    %82 = arith.mulf %78, %81 : vector<16x1xf32>
    %83 = arith.mulf %80, %80 : vector<16x1xf32>
    %84 = arith.subf %82, %83 : vector<16x1xf32>
    %85 = vector.broadcast %80 : vector<16x1xf32> to vector<16x32xf32>
    %86 = arith.subf %71, %85 : vector<16x32xf32>
    %cst_33 = arith.constant 9.99999996E-13 : f32
    %87 = vector.broadcast %cst_33 : f32 to vector<16x1xf32>
    %88 = arith.addf %84, %87 : vector<16x1xf32>
    %89 = math.rsqrt %88 : vector<16x1xf32>
    %90 = vector.broadcast %89 : vector<16x1xf32> to vector<16x32xf32>
    %91 = arith.mulf %86, %90 : vector<16x32xf32>
    %92 = vector.broadcast %72 : vector<1x32xf32> to vector<16x32xf32>
    %93 = arith.mulf %91, %92 : vector<16x32xf32>
    %94 = vector.broadcast %73 : vector<1x32xf32> to vector<16x32xf32>
    %95 = arith.addf %93, %94 : vector<16x32xf32>
    %96 = arith.truncf %95 : vector<16x32xf32> to vector<16x32xbf16>
    %cst_34 = arith.constant 0.000000e+00 : f32
    %97 = vector.broadcast %cst_34 : f32 to vector<16x32xf32>
    %c0_35 = arith.constant 0 : index
    %c0_36 = arith.constant 0 : index
    %98 = vector.load %arg8[%c0_35, %c0_36] : memref<32x128xbf16, #tpu.memory_space<vmem>>, vector<32x128xbf16>
    %cst_37 = arith.constant dense<0.000000e+00> : vector<16x128xf32>
    %99 = tpu.matmul %96, %98, %cst_37 {dimension_numbers = #tpu.dot_dimension_numbers<[1], [0], [0], [1], [0, 0, 1, 1], [], []>} : vector<16x32xbf16>, vector<32x128xbf16>, vector<16x128xf32> -> vector<16x128xf32>
    %c0_38 = arith.constant 0 : index
    %c0_39 = arith.constant 0 : index
    %100 = vector.load %arg9[%c0_38, %c0_39] : memref<1x128xf32, #tpu.memory_space<vmem>>, vector<1x128xf32>
    %101 = vector.broadcast %100 : vector<1x128xf32> to vector<16x128xf32>
    %102 = arith.addf %99, %101 : vector<16x128xf32>
    %103 = arith.mulf %102, %102 : vector<16x128xf32>
    %104 = arith.mulf %102, %103 : vector<16x128xf32>
    %cst_40 = arith.constant 4.471500e-02 : f32
    %105 = vector.broadcast %cst_40 : f32 to vector<16x128xf32>
    %106 = arith.mulf %105, %104 : vector<16x128xf32>
    %107 = arith.addf %102, %106 : vector<16x128xf32>
    %cst_41 = arith.constant 0.797884583 : f32
    %108 = vector.broadcast %cst_41 : f32 to vector<16x128xf32>
    %109 = arith.mulf %108, %107 : vector<16x128xf32>
    %110 = math.tanh %109 : vector<16x128xf32>
    %cst_42 = arith.constant 1.000000e+00 : f32
    %111 = vector.broadcast %cst_42 : f32 to vector<16x128xf32>
    %112 = arith.addf %111, %110 : vector<16x128xf32>
    %cst_43 = arith.constant 5.000000e-01 : f32
    %113 = vector.broadcast %cst_43 : f32 to vector<16x128xf32>
    %114 = arith.mulf %113, %112 : vector<16x128xf32>
    %115 = arith.mulf %102, %114 : vector<16x128xf32>
    %116 = arith.truncf %115 : vector<16x128xf32> to vector<16x128xbf16>
    %c0_44 = arith.constant 0 : index
    %c0_45 = arith.constant 0 : index
    %117 = vector.load %arg10[%c0_44, %c0_45] : memref<128x32xbf16, #tpu.memory_space<vmem>>, vector<128x32xbf16>
    %cst_46 = arith.constant dense<0.000000e+00> : vector<16x32xf32>
    %118 = tpu.matmul %116, %117, %cst_46 {dimension_numbers = #tpu.dot_dimension_numbers<[1], [0], [0], [1], [0, 0, 1, 1], [], []>} : vector<16x128xbf16>, vector<128x32xbf16>, vector<16x32xf32> -> vector<16x32xf32>
    %119 = arith.addf %97, %118 : vector<16x32xf32>
    %120 = arith.addf %95, %119 : vector<16x32xf32>
    %c0_47 = arith.constant 0 : index
    %c0_48 = arith.constant 0 : index
    %121 = vector.load %arg11[%c0_47, %c0_48] : memref<1x32xf32, #tpu.memory_space<vmem>>, vector<1x32xf32>
    %122 = vector.broadcast %121 : vector<1x32xf32> to vector<16x32xf32>
    %123 = arith.addf %120, %122 : vector<16x32xf32>
    %c0_49 = arith.constant 0 : index
    %c0_50 = arith.constant 0 : index
    %124 = vector.load %arg12[%c0_49, %c0_50] : memref<1x32xf32, #tpu.memory_space<vmem>>, vector<1x32xf32>
    %c0_51 = arith.constant 0 : index
    %c0_52 = arith.constant 0 : index
    %125 = vector.load %arg13[%c0_51, %c0_52] : memref<1x32xf32, #tpu.memory_space<vmem>>, vector<1x32xf32>
    %cst_53 = arith.constant dense<0.000000e+00> : vector<16xf32>
    %126 = vector.multi_reduction <add>, %123, %cst_53 [1] : vector<16x32xf32> to vector<16xf32>
    %127 = vector.shape_cast %126 : vector<16xf32> to vector<16x1xf32>
    %128 = arith.mulf %123, %123 : vector<16x32xf32>
    %cst_54 = arith.constant dense<0.000000e+00> : vector<16xf32>
    %129 = vector.multi_reduction <add>, %128, %cst_54 [1] : vector<16x32xf32> to vector<16xf32>
    %130 = vector.shape_cast %129 : vector<16xf32> to vector<16x1xf32>
    %cst_55 = arith.constant 3.125000e-02 : f32
    %131 = vector.broadcast %cst_55 : f32 to vector<16x1xf32>
    %132 = arith.mulf %127, %131 : vector<16x1xf32>
    %cst_56 = arith.constant 3.125000e-02 : f32
    %133 = vector.broadcast %cst_56 : f32 to vector<16x1xf32>
    %134 = arith.mulf %130, %133 : vector<16x1xf32>
    %135 = arith.mulf %132, %132 : vector<16x1xf32>
    %136 = arith.subf %134, %135 : vector<16x1xf32>
    %137 = vector.broadcast %132 : vector<16x1xf32> to vector<16x32xf32>
    %138 = arith.subf %123, %137 : vector<16x32xf32>
    %cst_57 = arith.constant 9.99999996E-13 : f32
    %139 = vector.broadcast %cst_57 : f32 to vector<16x1xf32>
    %140 = arith.addf %136, %139 : vector<16x1xf32>
    %141 = math.rsqrt %140 : vector<16x1xf32>
    %142 = vector.broadcast %141 : vector<16x1xf32> to vector<16x32xf32>
    %143 = arith.mulf %138, %142 : vector<16x32xf32>
    %144 = vector.broadcast %124 : vector<1x32xf32> to vector<16x32xf32>
    %145 = arith.mulf %143, %144 : vector<16x32xf32>
    %146 = vector.broadcast %125 : vector<1x32xf32> to vector<16x32xf32>
    %147 = arith.addf %145, %146 : vector<16x32xf32>
    %c0_58 = arith.constant 0 : index
    %c0_59 = arith.constant 0 : index
    %c0_60 = arith.constant 0 : index
    %148 = vector.load %arg3[%c0_58, %c0_59, %c0_60] : memref<2x1x8xf32, #tpu.memory_space<vmem>>, vector<1x1x8xf32>
    %149 = vector.shape_cast %148 : vector<1x1x8xf32> to vector<1x8xf32>
    %150 = vector.extract_strided_slice %147 {offsets = [0, 0], sizes = [8, 32], strides = [1, 1]} : vector<16x32xf32> to vector<8x32xf32>
    %cst_61 = arith.constant dense<0.000000e+00> : vector<1x32xf32>
    %151 = tpu.matmul %149, %150, %cst_61 {dimension_numbers = #tpu.dot_dimension_numbers<[1], [0], [0], [1], [0, 0, 1, 1], [], []>} : vector<1x8xf32>, vector<8x32xf32>, vector<1x32xf32> -> vector<1x32xf32>
    %c0_62 = arith.constant 0 : index
    %c0_63 = arith.constant 0 : index
    %c0_64 = arith.constant 0 : index
    %152 = vector.load %arg14[%c0_62, %c0_63, %c0_64] : memref<2x1x32xf32, #tpu.memory_space<vmem>>, vector<1x1x32xf32>
    %153 = vector.shape_cast %152 : vector<1x1x32xf32> to vector<1x32xf32>
    %154 = vector.shape_cast %151 : vector<1x32xf32> to vector<1x1x32xf32>
    tpu.vector_store %arg14[%c0_62, %c0_63, %c0_64], %154 {strides = array<i32>} : memref<2x1x32xf32, #tpu.memory_space<vmem>>, vector<1x1x32xf32>,
    %c1_65 = arith.constant 1 : index
    %c0_66 = arith.constant 0 : index
    %c0_67 = arith.constant 0 : index
    %155 = vector.load %arg3[%c1_65, %c0_66, %c0_67] : memref<2x1x8xf32, #tpu.memory_space<vmem>>, vector<1x1x8xf32>
    %156 = vector.shape_cast %155 : vector<1x1x8xf32> to vector<1x8xf32>
    %157 = vector.extract_strided_slice %147 {offsets = [8, 0], sizes = [8, 32], strides = [1, 1]} : vector<16x32xf32> to vector<8x32xf32>
    %cst_68 = arith.constant dense<0.000000e+00> : vector<1x32xf32>
    %158 = tpu.matmul %156, %157, %cst_68 {dimension_numbers = #tpu.dot_dimension_numbers<[1], [0], [0], [1], [0, 0, 1, 1], [], []>} : vector<1x8xf32>, vector<8x32xf32>, vector<1x32xf32> -> vector<1x32xf32>
    %c1_69 = arith.constant 1 : index
    %c0_70 = arith.constant 0 : index
    %c0_71 = arith.constant 0 : index
    %159 = vector.load %arg14[%c1_69, %c0_70, %c0_71] : memref<2x1x32xf32, #tpu.memory_space<vmem>>, vector<1x1x32xf32>
    %160 = vector.shape_cast %159 : vector<1x1x32xf32> to vector<1x32xf32>
    %161 = vector.shape_cast %158 : vector<1x32xf32> to vector<1x1x32xf32>
    tpu.vector_store %arg14[%c1_69, %c0_70, %c0_71], %161 {strides = array<i32>} : memref<2x1x32xf32, #tpu.memory_space<vmem>>, vector<1x1x32xf32>,
    return
  }
  func.func @transform_0(%arg0: i32) -> (i32, i32) {
    %c0_i32 = arith.constant 0 : i32
    %c0_i32_0 = arith.constant 0 : i32
    return %arg0, %c0_i32 : i32, i32
  }
  func.func @transform_1(%arg0: i32) -> (i32, i32, i32) {
    %c0_i32 = arith.constant 0 : i32
    %c0_i32_0 = arith.constant 0 : i32
    %c0_i32_1 = arith.constant 0 : i32
    return %arg0, %c0_i32, %c0_i32_0 : i32, i32, i32
  }
  func.func @transform_2(%arg0: i32) -> (i32, i32, i32) {
    %c0_i32 = arith.constant 0 : i32
    %c0_i32_0 = arith.constant 0 : i32
    %c0_i32_1 = arith.constant 0 : i32
    return %arg0, %c0_i32, %c0_i32_0 : i32, i32, i32
  }
  func.func @transform_3(%arg0: i32) -> (i32, i32) {
    %c0_i32 = arith.constant 0 : i32
    %c0_i32_0 = arith.constant 0 : i32
    %c0_i32_1 = arith.constant 0 : i32
    return %c0_i32, %c0_i32_0 : i32, i32
  }
  func.func @transform_4(%arg0: i32) -> (i32, i32) {
    %c0_i32 = arith.constant 0 : i32
    %c0_i32_0 = arith.constant 0 : i32
    %c0_i32_1 = arith.constant 0 : i32
    return %c0_i32, %c0_i32_0 : i32, i32
  }
  func.func @transform_5(%arg0: i32) -> (i32, i32) {
    %c0_i32 = arith.constant 0 : i32
    %c0_i32_0 = arith.constant 0 : i32
    %c0_i32_1 = arith.constant 0 : i32
    return %c0_i32, %c0_i32_0 : i32, i32
  }
  func.func @transform_6(%arg0: i32) -> (i32, i32) {
    %c0_i32 = arith.constant 0 : i32
    %c0_i32_0 = arith.constant 0 : i32
    %c0_i32_1 = arith.constant 0 : i32
    return %c0_i32, %c0_i32_0 : i32, i32
  }
  func.func @transform_7(%arg0: i32) -> (i32, i32) {
    %c0_i32 = arith.constant 0 : i32
    %c0_i32_0 = arith.constant 0 : i32
    %c0_i32_1 = arith.constant 0 : i32
    return %c0_i32, %c0_i32_0 : i32, i32
  }
  func.func @transform_8(%arg0: i32) -> (i32, i32) {
    %c0_i32 = arith.constant 0 : i32
    %c0_i32_0 = arith.constant 0 : i32
    %c0_i32_1 = arith.constant 0 : i32
    return %c0_i32, %c0_i32_0 : i32, i32
  }
  func.func @transform_9(%arg0: i32) -> (i32, i32) {
    %c0_i32 = arith.constant 0 : i32
    %c0_i32_0 = arith.constant 0 : i32
    %c0_i32_1 = arith.constant 0 : i32
    return %c0_i32, %c0_i32_0 : i32, i32
  }
  func.func @transform_10(%arg0: i32) -> (i32, i32) {
    %c0_i32 = arith.constant 0 : i32
    %c0_i32_0 = arith.constant 0 : i32
    %c0_i32_1 = arith.constant 0 : i32
    return %c0_i32, %c0_i32_0 : i32, i32
  }
  func.func @transform_11(%arg0: i32) -> (i32, i32) {
    %c0_i32 = arith.constant 0 : i32
    %c0_i32_0 = arith.constant 0 : i32
    %c0_i32_1 = arith.constant 0 : i32
    return %c0_i32, %c0_i32_0 : i32, i32
  }
  func.func @transform_12(%arg0: i32) -> (i32, i32) {
    %c0_i32 = arith.constant 0 : i32
    %c0_i32_0 = arith.constant 0 : i32
    %c0_i32_1 = arith.constant 0 : i32
    return %c0_i32, %c0_i32_0 : i32, i32
  }
  func.func @transform_13(%arg0: i32) -> (i32, i32, i32) {
    %c0_i32 = arith.constant 0 : i32
    %c0_i32_0 = arith.constant 0 : i32
    %c0_i32_1 = arith.constant 0 : i32
    return %arg0, %c0_i32, %c0_i32_0 : i32, i32, i32
  }
}

</mosaic_0001>

<llo_original>
// kernel: tpu_custom_call.1
$region0: #{tpu_custom_call.1}
  #allocation0 [shape = 'u32[]', space=smem, size = 0x4, offset = 0x4, fixed_abs, tag = 'smem constant byte address 0x4 - core index']
  #allocation1 [shape = 'u32[144,128]{1,0:T(1,128)}', space=vmem, size = 0x12000, scoped, tag = 'internal scratch']
  %s0 = inlined_call_operand.vmem [shape: bf16[16,32], index: 0, kind: input, shape index: {}]
  %s1 = inlined_call_operand.vmem [shape: f32[2,1,8], index: 1, kind: input, shape index: {}]
  %s2 = inlined_call_operand.vmem [shape: f32[2,1,8], index: 2, kind: input, shape index: {}]
  %s3 = inlined_call_operand.vmem [shape: bf16[32,96], index: 3, kind: input, shape index: {}]
  %s4 = inlined_call_operand.vmem [shape: bf16[32,32], index: 4, kind: input, shape index: {}]
  %s5 = inlined_call_operand.vmem [shape: f32[1,32], index: 5, kind: input, shape index: {}]
  %s6 = inlined_call_operand.vmem [shape: f32[1,32], index: 6, kind: input, shape index: {}]
  %s7 = inlined_call_operand.vmem [shape: bf16[32,128], index: 7, kind: input, shape index: {}]
  %s8 = inlined_call_operand.vmem [shape: f32[1,128], index: 8, kind: input, shape index: {}]
  %s9 = inlined_call_operand.vmem [shape: bf16[128,32], index: 9, kind: input, shape index: {}]
  %s10 = inlined_call_operand.vmem [shape: f32[1,32], index: 10, kind: input, shape index: {}]
  %s11 = inlined_call_operand.vmem [shape: f32[1,32], index: 11, kind: input, shape index: {}]
  %s12 = inlined_call_operand.vmem [shape: f32[1,32], index: 12, kind: input, shape index: {}]
  %s13 = inlined_call_operand.hbm [shape: f32[2,1,32], index: 13, kind: output, shape index: {}]
  %s14 = sld [smem:[#allocation0]]
  $region62: #{tpu_custom_call.1} parent=0
    _
  %s16 = ssub.s32 1, %s14
  %s17 = scalar_select 0, %s16, %s14
  $region1: #{tpu_custom_call.1} parent=0
    #allocation2 [shape = 'u8[1024]{0}', space=vmem, size = 0x400, scoped, tag = 'output window, operand 0, single buffered']
    #allocation3 [shape = 's32[1]{0}', space=sflag, size = 0x4, scoped, tag = 'scoped memory for tpu_custom_call.1']
    %18 = vsyncpa [#allocation3], 0
    // Predicated region
    $region2: #{tpu_custom_call.1} parent=1 // pred_check
      _
    $region3: #{tpu_custom_call.1} parent=1 // pred_check_branch
      %20 = sbr.rel (0) target = $region5
    $region4: #{tpu_custom_call.1} parent=1 // pred_region
      _
    $region5: #{tpu_custom_call.1} parent=1 // pred_fallthru
      _
    // Predicated region
    $region6: #{tpu_custom_call.1} parent=1 // pred_check
      _
    $region7: #{tpu_custom_call.1} parent=1 // pred_check_branch
      %22 = sbr.rel (0) target = $region9
    $region8: #{tpu_custom_call.1} parent=1 // pred_region
      _
    $region9: #{tpu_custom_call.1} parent=1 // pred_fallthru
      _
    // Predicated region
    $region10: #{tpu_custom_call.1} parent=1 // pred_check
      _
    $region11: #{tpu_custom_call.1} parent=1 // pred_check_branch
      %24 = sbr.rel (0) target = $region13
    $region12: #{tpu_custom_call.1} parent=1 // pred_region
      _
    $region13: #{tpu_custom_call.1} parent=1 // pred_fallthru
      _
    // Predicated region
    $region14: #{tpu_custom_call.1} parent=1 // pred_check
      _
    $region15: #{tpu_custom_call.1} parent=1 // pred_check_branch
      %26 = sbr.rel (0) target = $region17
    $region16: #{tpu_custom_call.1} parent=1 // pred_region
      _
    $region17: #{tpu_custom_call.1} parent=1 // pred_fallthru
      _
    // Predicated region
    $region18: #{tpu_custom_call.1} parent=1 // pred_check
      _
    $region19: #{tpu_custom_call.1} parent=1 // pred_check_branch
      %28 = sbr.rel (0) target = $region21
    $region20: #{tpu_custom_call.1} parent=1 // pred_region
      _
    $region21: #{tpu_custom_call.1} parent=1 // pred_fallthru
      _
    // Predicated region
    $region22: #{tpu_custom_call.1} parent=1 // pred_check
      _
    $region23: #{tpu_custom_call.1} parent=1 // pred_check_branch
      %30 = sbr.rel (0) target = $region25
    $region24: #{tpu_custom_call.1} parent=1 // pred_region
      _
    $region25: #{tpu_custom_call.1} parent=1 // pred_fallthru
      _
    // Predicated region
    $region26: #{tpu_custom_call.1} parent=1 // pred_check
      _
    $region27: #{tpu_custom_call.1} parent=1 // pred_check_branch
      %32 = sbr.rel (0) target = $region29
    $region28: #{tpu_custom_call.1} parent=1 // pred_region
      _
    $region29: #{tpu_custom_call.1} parent=1 // pred_fallthru
      _
    // Predicated region
    $region30: #{tpu_custom_call.1} parent=1 // pred_check
      _
    $region31: #{tpu_custom_call.1} parent=1 // pred_check_branch
      %34 = sbr.rel (0) target = $region33
    $region32: #{tpu_custom_call.1} parent=1 // pred_region
      _
    $region33: #{tpu_custom_call.1} parent=1 // pred_fallthru
      _
    // Predicated region
    $region34: #{tpu_custom_call.1} parent=1 // pred_check
      _
    $region35: #{tpu_custom_call.1} parent=1 // pred_check_branch
      %36 = sbr.rel (0) target = $region37
    $region36: #{tpu_custom_call.1} parent=1 // pred_region
      _
    $region37: #{tpu_custom_call.1} parent=1 // pred_fallthru
      _
    // Predicated region
    $region38: #{tpu_custom_call.1} parent=1 // pred_check
      _
    $region39: #{tpu_custom_call.1} parent=1 // pred_check_branch
      %38 = sbr.rel (0) target = $region41
    $region40: #{tpu_custom_call.1} parent=1 // pred_region
      _
    $region41: #{tpu_custom_call.1} parent=1 // pred_fallthru
      _
    // Predicated region
    $region42: #{tpu_custom_call.1} parent=1 // pred_check
      _
    $region43: #{tpu_custom_call.1} parent=1 // pred_check_branch
      %40 = sbr.rel (0) target = $region45
    $region44: #{tpu_custom_call.1} parent=1 // pred_region
      _
    $region45: #{tpu_custom_call.1} parent=1 // pred_fallthru
      _
    // Predicated region
    $region46: #{tpu_custom_call.1} parent=1 // pred_check
      _
    $region47: #{tpu_custom_call.1} parent=1 // pred_check_branch
      %42 = sbr.rel (0) target = $region49
    $region48: #{tpu_custom_call.1} parent=1 // pred_region
      _
    $region49: #{tpu_custom_call.1} parent=1 // pred_fallthru
      _
    // Predicated region
    $region50: #{tpu_custom_call.1} parent=1 // pred_check
      _
    $region51: #{tpu_custom_call.1} parent=1 // pred_check_branch
      %44 = sbr.rel (0) target = $region53
    $region52: #{tpu_custom_call.1} parent=1 // pred_region
      _
    $region53: #{tpu_custom_call.1} parent=1 // pred_fallthru
      _
    %v46 = vld [vmem:[%s0] sm:$0xf]
    %v47 = vld [vmem:[%s0 + $0x4] sm:$0xf]
    %v48 = vunpack.c.l.bf16 %v46
    %v49 = vunpack.c.l.bf16 %v47
    %v50 = vld [vmem:[%s3] sm:$0xf]
    %v51 = vld [vmem:[%s3 + $0x4] sm:$0xf]
    %v52 = vld [vmem:[%s3 + $0x8] sm:$0xf]
    %v53 = vld [vmem:[%s3 + $0xc] sm:$0xf]
    %v56 = vunpack.c.l.b16 %v46
    %v57 = vunpack.c.l.b16 %v47
    %v58 = vpack.c.b16 %v57, %v56
    %v63 = vunpack.c.l.b16 %v50
    %v64 = vunpack.c.l.b16 %v51
    %v65 = vunpack.c.l.b16 %v52
    %v66 = vunpack.c.l.b16 %v53
    %v67 = vpack.c.b16 %v64, %v63
    %v68 = vpack.c.b16 %v66, %v65
    %vm71 = vcmask 261120
    %v73 = vsel %vm71, %v58, 0
    %75 = vmatprep.subr.bf16.mxu0 0
    %76 = vmatpush1.bf16.msra.mxu0 %v67
    %77 = vmatprep.subr.bf16.mxu0 0
    %78 = vmatpush1.bf16.msra.mxu0 %v68
    %79 = vmatprep.subr.bf16.mxu0 0
    %80 = vmatpush1.bf16.msra.mxu0 0
    %81 = vmatprep.subr.bf16.mxu0 0
    %82 = vmatpush1.bf16.msra.mxu0 0
    %83 = vmatprep.subr.bf16.mxu0 0
    %84 = vmatpush1.bf16.msra.mxu0 0
    %85 = vmatprep.subr.bf16.mxu0 0
    %86 = vmatpush1.bf16.msra.mxu0 0
    %87 = vmatprep.subr.bf16.mxu0 0
    %88 = vmatpush1.bf16.msra.mxu0 0
    %89 = vmatprep.subr.bf16.mxu0 0
    %90 = vmatpush1.bf16.msra.mxu0 0
    %91 = vmatprep.subr.bf16.mxu0 0
    %92 = vmatpush1.bf16.msra.mxu0 0
    %93 = vmatprep.subr.bf16.mxu0 0
    %94 = vmatpush1.bf16.msra.mxu0 0
    %95 = vmatprep.subr.bf16.mxu0 0
    %96 = vmatpush1.bf16.msra.mxu0 0
    %97 = vmatprep.subr.bf16.mxu0 0
    %98 = vmatpush1.bf16.msra.mxu0 0
    %99 = vmatprep.subr.bf16.mxu0 0
    %100 = vmatpush1.bf16.msra.mxu0 0
    %101 = vmatprep.subr.bf16.mxu0 0
    %102 = vmatpush1.bf16.msra.mxu0 0
    %103 = vmatprep.subr.bf16.mxu0 0
    %104 = vmatpush1.bf16.msra.mxu0 0
    %105 = vmatprep.subr.bf16.mxu0 0
    %106 = vmatpush1.bf16.msra.mxu0 0
    %107 = vmatprep.mubr.bf16.mxu0 0
    %108 = vmatmul.mubr.bf16.gmra.mrb[0].mxu0 %v73
    %v109 = vpop.f32.mrb[0].mxu0
    %v110 = vadd.f32 0.0, %v109
    %v111 = vpop.f32.mrb[0].mxu0
    %v112 = vpop.f32.mrb[0].mxu0
    %v113 = vadd.f32 0.0, %v112
    %v114 = vpop.f32.mrb[0].mxu0
    %115 = vdwg.mxu0
    %v116 = vpack.c.bf16 %v113, %v110
    %v117 = vld [vmem:[%s1] sm:$0x1]
    %v119 = vlaneseq
    %v120 = vshrl.u32 %v119, 7
    %v121 = vsub.s32 0, %v120
    %v122 = vrot.slane %v117, %v121
    %125 = vrot.lane.b32.xlu0 %v116, 96
    %v126 = vpop.permute.xlu0 %125
    %v128 = vsel %vm71, %v116, 0
    %v131 = vsel %vm71, %v126, 0
    %133 = vmatprep.subr.bf16.mxu0 0
    %134 = vmatpush1.bf16.xpose.msra.mxu0 %v131
    %135 = vmatprep.subr.bf16.mxu0 0
    %136 = vmatpush1.bf16.xpose.msra.mxu0 0
    %137 = vmatprep.subr.bf16.mxu0 0
    %138 = vmatpush1.bf16.xpose.msra.mxu0 0
    %139 = vmatprep.subr.bf16.mxu0 0
    %140 = vmatpush1.bf16.xpose.msra.mxu0 0
    %141 = vmatprep.subr.bf16.mxu0 0
    %142 = vmatpush1.bf16.xpose.msra.mxu0 0
    %143 = vmatprep.subr.bf16.mxu0 0
    %144 = vmatpush1.bf16.xpose.msra.mxu0 0
    %145 = vmatprep.subr.bf16.mxu0 0
    %146 = vmatpush1.bf16.xpose.msra.mxu0 0
    %147 = vmatprep.subr.bf16.mxu0 0
    %148 = vmatpush1.bf16.xpose.msra.mxu0 0
    %149 = vmatprep.subr.bf16.mxu0 0
    %150 = vmatpush1.bf16.xpose.msra.mxu0 0
    %151 = vmatprep.subr.bf16.mxu0 0
    %152 = vmatpush1.bf16.xpose.msra.mxu0 0
    %153 = vmatprep.subr.bf16.mxu0 0
    %154 = vmatpush1.bf16.xpose.msra.mxu0 0
    %155 = vmatprep.subr.bf16.mxu0 0
    %156 = vmatpush1.bf16.xpose.msra.mxu0 0
    %157 = vmatprep.subr.bf16.mxu0 0
    %158 = vmatpush1.bf16.xpose.msra.mxu0 0
    %159 = vmatprep.subr.bf16.mxu0 0
    %160 = vmatpush1.bf16.xpose.msra.mxu0 0
    %161 = vmatprep.subr.bf16.mxu0 0
    %162 = vmatpush1.bf16.xpose.msra.mxu0 0
    %163 = vmatprep.subr.bf16.mxu0 0
    %164 = vmatpush1.bf16.xpose.msra.mxu0 0
    %165 = vmatprep.mubr.bf16.mxu0 0
    %166 = vmatmul.mubr.bf16.gmra.mrb[0].mxu0 %v128
    %v167 = vpop.f32.mrb[0].mxu0
    %v168 = vadd.f32 %v122, %v167
    %v169 = vpop.f32.mrb[0].mxu0
    %v170 = vpop.f32.mrb[0].mxu0
    %v171 = vpop.f32.mrb[0].mxu0
    %172 = vdwg.mxu0
    %vm173 = vcmask 64512
    %v174 = vsel %vm173, %v168, -inf
    %175 = vmax.xlane.f32.xlu0 %v174
    %v176 = vpop.xlane.xlu0 %175
    %v177 = vsub.f32 -inf, %v176
    %v178 = vmul.f32 %v177, 1.442695
    %v179 = vpow.pop %v178
    %v180 = vsub.f32 %v168, %v176
    %v181 = vmul.f32 %v180, 1.442695
    %v182 = vpow.pop %v181
    %v183 = vmul.f32 %v179, 0.0
    %v184 = vsel %vm173, %v182, 0.0
    %185 = vadd.xlane.f32.xlu0 %v184
    %v186 = vpop.xlane.xlu0 %185
    %v187 = vadd.f32 %v183, %v186
    %v188 = vpack.c.bf16 %v182, %v182
    %189 = vrot.lane.b32.xlu0 %v116, 64
    %v190 = vpop.permute.xlu0 %189
    %v192 = vsel %vm173, %v188, 0
    %vm194 = vcmask 1043456
    %v196 = vsel %vm194, %v190, 0
    %198 = vmatprep.subr.bf16.mxu0 0
    %199 = vmatpush1.bf16.msra.mxu0 %v196
    %200 = vmatprep.subr.bf16.mxu0 0
    %201 = vmatpush1.bf16.msra.mxu0 0
    %202 = vmatprep.subr.bf16.mxu0 0
    %203 = vmatpush1.bf16.msra.mxu0 0
    %204 = vmatprep.subr.bf16.mxu0 0
    %205 = vmatpush1.bf16.msra.mxu0 0
    %206 = vmatprep.subr.bf16.mxu0 0
    %207 = vmatpush1.bf16.msra.mxu0 0
    %208 = vmatprep.subr.bf16.mxu0 0
    %209 = vmatpush1.bf16.msra.mxu0 0
    %210 = vmatprep.subr.bf16.mxu0 0
    %211 = vmatpush1.bf16.msra.mxu0 0
    %212 = vmatprep.subr.bf16.mxu0 0
    %213 = vmatpush1.bf16.msra.mxu0 0
    %214 = vmatprep.subr.bf16.mxu0 0
    %215 = vmatpush1.bf16.msra.mxu0 0
    %216 = vmatprep.subr.bf16.mxu0 0
    %217 = vmatpush1.bf16.msra.mxu0 0
    %218 = vmatprep.subr.bf16.mxu0 0
    %219 = vmatpush1.bf16.msra.mxu0 0
    %220 = vmatprep.subr.bf16.mxu0 0
    %221 = vmatpush1.bf16.msra.mxu0 0
    %222 = vmatprep.subr.bf16.mxu0 0
    %223 = vmatpush1.bf16.msra.mxu0 0
    %224 = vmatprep.subr.bf16.mxu0 0
    %225 = vmatpush1.bf16.msra.mxu0 0
    %226 = vmatprep.subr.bf16.mxu0 0
    %227 = vmatpush1.bf16.msra.mxu0 0
    %228 = vmatprep.subr.bf16.mxu0 0
    %229 = vmatpush1.bf16.msra.mxu0 0
    %230 = vmatprep.mubr.bf16.mxu0 0
    %231 = vmatmul.mubr.bf16.gmra.mrb[0].mxu0 %v192
    %v232 = vpop.f32.mrb[0].mxu0
    %v233 = vadd.f32 0.0, %v232
    %v234 = vpop.f32.mrb[0].mxu0
    %v235 = vpop.f32.mrb[0].mxu0
    %v236 = vpop.f32.mrb[0].mxu0
    %237 = vdwg.mxu0
    %v238 = vadd.f32 %v183, %v233
    %v239 = vrcp.pop %v187
    %v240 = vmul.f32 %v238, %v239
    %s241 = scalar_lea.vmem %s1, 1
    %v242 = vld [vmem:[%s241] sm:$0x1]
    %v244 = vlaneseq
    %v245 = vshrl.u32 %v244, 7
    %v246 = vsub.s32 0, %v245
    %v247 = vrot.slane %v242, %v246
    %v249 = vrot.slane %v116, 4
    %250 = vrot.lane.b32.xlu0 %v249, 96
    %v251 = vpop.permute.xlu0 %250
    %v253 = vsel %vm71, %v249, 0
    %v256 = vsel %vm71, %v251, 0
    %258 = vmatprep.subr.bf16.mxu0 0
    %259 = vmatpush1.bf16.xpose.msra.mxu0 %v256
    %260 = vmatprep.subr.bf16.mxu0 0
    %261 = vmatpush1.bf16.xpose.msra.mxu0 0
    %262 = vmatprep.subr.bf16.mxu0 0
    %263 = vmatpush1.bf16.xpose.msra.mxu0 0
    %264 = vmatprep.subr.bf16.mxu0 0
    %265 = vmatpush1.bf16.xpose.msra.mxu0 0
    %266 = vmatprep.subr.bf16.mxu0 0
    %267 = vmatpush1.bf16.xpose.msra.mxu0 0
    %268 = vmatprep.subr.bf16.mxu0 0
    %269 = vmatpush1.bf16.xpose.msra.mxu0 0
    %270 = vmatprep.subr.bf16.mxu0 0
    %271 = vmatpush1.bf16.xpose.msra.mxu0 0
    %272 = vmatprep.subr.bf16.mxu0 0
    %273 = vmatpush1.bf16.xpose.msra.mxu0 0
    %274 = vmatprep.subr.bf16.mxu0 0
    %275 = vmatpush1.bf16.xpose.msra.mxu0 0
    %276 = vmatprep.subr.bf16.mxu0 0
    %277 = vmatpush1.bf16.xpose.msra.mxu0 0
    %278 = vmatprep.subr.bf16.mxu0 0
    %279 = vmatpush1.bf16.xpose.msra.mxu0 0
    %280 = vmatprep.subr.bf16.mxu0 0
    %281 = vmatpush1.bf16.xpose.msra.mxu0 0
    %282 = vmatprep.subr.bf16.mxu0 0
    %283 = vmatpush1.bf16.xpose.msra.mxu0 0
    %284 = vmatprep.subr.bf16.mxu0 0
    %285 = vmatpush1.bf16.xpose.msra.mxu0 0
    %286 = vmatprep.subr.bf16.mxu0 0
    %287 = vmatpush1.bf16.xpose.msra.mxu0 0
    %288 = vmatprep.subr.bf16.mxu0 0
    %289 = vmatpush1.bf16.xpose.msra.mxu0 0
    %290 = vmatprep.mubr.bf16.mxu0 0
    %291 = vmatmul.mubr.bf16.gmra.mrb[0].mxu0 %v253
    %v292 = vpop.f32.mrb[0].mxu0
    %v293 = vadd.f32 %v247, %v292
    %v294 = vpop.f32.mrb[0].mxu0
    %v295 = vpop.f32.mrb[0].mxu0
    %v296 = vpop.f32.mrb[0].mxu0
    %297 = vdwg.mxu0
    %v298 = vsel %vm173, %v293, -inf
    %299 = vmax.xlane.f32.xlu0 %v298
    %v300 = vpop.xlane.xlu0 %299
    %v301 = vsub.f32 -inf, %v300
    %v302 = vmul.f32 %v301, 1.442695
    %v303 = vpow.pop %v302
    %v304 = vsub.f32 %v293, %v300
    %v305 = vmul.f32 %v304, 1.442695
    %v306 = vpow.pop %v305
    %v307 = vmul.f32 %v303, 0.0
    %v308 = vsel %vm173, %v306, 0.0
    %309 = vadd.xlane.f32.xlu0 %v308
    %v310 = vpop.xlane.xlu0 %309
    %v311 = vadd.f32 %v307, %v310
    %v312 = vpack.c.bf16 %v306, %v306
    %313 = vrot.lane.b32.xlu0 %v249, 64
    %v314 = vpop.permute.xlu0 %313
    %v316 = vsel %vm173, %v312, 0
    %v319 = vsel %vm194, %v314, 0
    %321 = vmatprep.subr.bf16.mxu0 0
    %322 = vmatpush1.bf16.msra.mxu0 %v319
    %323 = vmatprep.subr.bf16.mxu0 0
    %324 = vmatpush1.bf16.msra.mxu0 0
    %325 = vmatprep.subr.bf16.mxu0 0
    %326 = vmatpush1.bf16.msra.mxu0 0
    %327 = vmatprep.subr.bf16.mxu0 0
    %328 = vmatpush1.bf16.msra.mxu0 0
    %329 = vmatprep.subr.bf16.mxu0 0
    %330 = vmatpush1.bf16.msra.mxu0 0
    %331 = vmatprep.subr.bf16.mxu0 0
    %332 = vmatpush1.bf16.msra.mxu0 0
    %333 = vmatprep.subr.bf16.mxu0 0
    %334 = vmatpush1.bf16.msra.mxu0 0
    %335 = vmatprep.subr.bf16.mxu0 0
    %336 = vmatpush1.bf16.msra.mxu0 0
    %337 = vmatprep.subr.bf16.mxu0 0
    %338 = vmatpush1.bf16.msra.mxu0 0
    %339 = vmatprep.subr.bf16.mxu0 0
    %340 = vmatpush1.bf16.msra.mxu0 0
    %341 = vmatprep.subr.bf16.mxu0 0
    %342 = vmatpush1.bf16.msra.mxu0 0
    %343 = vmatprep.subr.bf16.mxu0 0
    %344 = vmatpush1.bf16.msra.mxu0 0
    %345 = vmatprep.subr.bf16.mxu0 0
    %346 = vmatpush1.bf16.msra.mxu0 0
    %347 = vmatprep.subr.bf16.mxu0 0
    %348 = vmatpush1.bf16.msra.mxu0 0
    %349 = vmatprep.subr.bf16.mxu0 0
    %350 = vmatpush1.bf16.msra.mxu0 0
    %351 = vmatprep.subr.bf16.mxu0 0
    %352 = vmatpush1.bf16.msra.mxu0 0
    %353 = vmatprep.mubr.bf16.mxu0 0
    %354 = vmatmul.mubr.bf16.gmra.mrb[0].mxu0 %v316
    %v355 = vpop.f32.mrb[0].mxu0
    %v356 = vadd.f32 0.0, %v355
    %v357 = vpop.f32.mrb[0].mxu0
    %v358 = vpop.f32.mrb[0].mxu0
    %v359 = vpop.f32.mrb[0].mxu0
    %360 = vdwg.mxu0
    %v361 = vadd.f32 %v307, %v356
    %v362 = vrcp.pop %v311
    %v363 = vmul.f32 %v361, %v362
    %v364 = vpack.c.bf16 %v363, %v240
    %v365 = vld [vmem:[%s4] sm:$0xf]
    %v366 = vld [vmem:[%s4 + $0x4] sm:$0xf]
    %v367 = vld [vmem:[%s4 + $0x8] sm:$0xf]
    %v368 = vld [vmem:[%s4 + $0xc] sm:$0xf]
    %v373 = vunpack.c.l.b16 %v365
    %v374 = vunpack.c.l.b16 %v366
    %v375 = vunpack.c.l.b16 %v367
    %v376 = vunpack.c.l.b16 %v368
    %v377 = vpack.c.b16 %v374, %v373
    %v378 = vpack.c.b16 %v376, %v375
    %v382 = vsel %vm71, %v364, 0
    %384 = vmatprep.subr.bf16.mxu0 0
    %385 = vmatpush1.bf16.msra.mxu0 %v377
    %386 = vmatprep.subr.bf16.mxu0 0
    %387 = vmatpush1.bf16.msra.mxu0 %v378
    %388 = vmatprep.subr.bf16.mxu0 0
    %389 = vmatpush1.bf16.msra.mxu0 0
    %390 = vmatprep.subr.bf16.mxu0 0
    %391 = vmatpush1.bf16.msra.mxu0 0
    %392 = vmatprep.subr.bf16.mxu0 0
    %393 = vmatpush1.bf16.msra.mxu0 0
    %394 = vmatprep.subr.bf16.mxu0 0
    %395 = vmatpush1.bf16.msra.mxu0 0
    %396 = vmatprep.subr.bf16.mxu0 0
    %397 = vmatpush1.bf16.msra.mxu0 0
    %398 = vmatprep.subr.bf16.mxu0 0
    %399 = vmatpush1.bf16.msra.mxu0 0
    %400 = vmatprep.subr.bf16.mxu0 0
    %401 = vmatpush1.bf16.msra.mxu0 0
    %402 = vmatprep.subr.bf16.mxu0 0
    %403 = vmatpush1.bf16.msra.mxu0 0
    %404 = vmatprep.subr.bf16.mxu0 0
    %405 = vmatpush1.bf16.msra.mxu0 0
    %406 = vmatprep.subr.bf16.mxu0 0
    %407 = vmatpush1.bf16.msra.mxu0 0
    %408 = vmatprep.subr.bf16.mxu0 0
    %409 = vmatpush1.bf16.msra.mxu0 0
    %410 = vmatprep.subr.bf16.mxu0 0
    %411 = vmatpush1.bf16.msra.mxu0 0
    %412 = vmatprep.subr.bf16.mxu0 0
    %413 = vmatpush1.bf16.msra.mxu0 0
    %414 = vmatprep.subr.bf16.mxu0 0
    %415 = vmatpush1.bf16.msra.mxu0 0
    %416 = vmatprep.mubr.bf16.mxu0 0
    %417 = vmatmul.mubr.bf16.gmra.mrb[0].mxu0 %v382
    %v418 = vpop.f32.mrb[0].mxu0
    %v419 = vadd.f32 0.0, %v418
    %v420 = vpop.f32.mrb[0].mxu0
    %v421 = vpop.f32.mrb[0].mxu0
    %v422 = vadd.f32 0.0, %v421
    %v423 = vpop.f32.mrb[0].mxu0
    %424 = vdwg.mxu0
    %v425 = vadd.f32 %v48, %v419
    %v426 = vadd.f32 %v49, %v422
    %v427 = vld [vmem:[%s5] sm:$0x1]
    %v428 = vld [vmem:[%s6] sm:$0x1]
    %v429 = vsel %vm71, %v425, 0.0
    %430 = vadd.xlane.f32.xlu0 %v429
    %v431 = vpop.xlane.xlu0 %430
    %v432 = vsel %vm71, %v426, 0.0
    %433 = vadd.xlane.f32.xlu0 %v432
    %v434 = vpop.xlane.xlu0 %433
    %v435 = vmul.f32 %v425, %v425
    %v436 = vmul.f32 %v426, %v426
    %v437 = vsel %vm71, %v435, 0.0
    %438 = vadd.xlane.f32.xlu0 %v437
    %v439 = vpop.xlane.xlu0 %438
    %v440 = vsel %vm71, %v436, 0.0
    %441 = vadd.xlane.f32.xlu0 %v440
    %v442 = vpop.xlane.xlu0 %441
    %v443 = vmul.f32 %v431, 0.03125
    %v444 = vmul.f32 %v434, 0.03125
    %v445 = vmul.f32 %v439, 0.03125
    %v446 = vmul.f32 %v442, 0.03125
    %v447 = vmul.f32 %v443, %v443
    %v448 = vmul.f32 %v444, %v444
    %v449 = vsub.f32 %v445, %v447
    %v450 = vsub.f32 %v446, %v448
    %v451 = vsub.f32 %v425, %v443
    %v452 = vsub.f32 %v426, %v444
    %v453 = vadd.f32 %v449, 1e-12
    %v454 = vadd.f32 %v450, 1e-12
    %v455 = vrsqrt.pop %v453
    %v456 = vrsqrt.pop %v454
    %v457 = vmul.f32 %v451, %v455
    %v458 = vmul.f32 %v452, %v456
    %v460 = vlaneseq
    %v461 = vshrl.u32 %v460, 7
    %v462 = vsub.s32 0, %v461
    %v463 = vrot.slane %v427, %v462
    %v465 = vmul.f32 %v457, %v463
    %v466 = vmul.f32 %v458, %v463
    %v468 = vlaneseq
    %v469 = vshrl.u32 %v468, 7
    %v470 = vsub.s32 0, %v469
    %v471 = vrot.slane %v428, %v470
    %v473 = vadd.f32 %v465, %v471
    %v474 = vadd.f32 %v466, %v471
    %v475 = vpack.c.bf16 %v474, %v473
    %v476 = vld [vmem:[%s7] sm:$0xf]
    %v477 = vld [vmem:[%s7 + $0x4] sm:$0xf]
    %v478 = vld [vmem:[%s7 + $0x8] sm:$0xf]
    %v479 = vld [vmem:[%s7 + $0xc] sm:$0xf]
    %v480 = vld [vmem:[%s8] sm:$0x1]
    %v482 = vlaneseq
    %v483 = vshrl.u32 %v482, 7
    %v484 = vsub.s32 0, %v483
    %v485 = vrot.slane %v480, %v484
    %v491 = vunpack.c.l.b16 %v476
    %v492 = vunpack.c.l.b16 %v477
    %v493 = vunpack.c.l.b16 %v478
    %v494 = vunpack.c.l.b16 %v479
    %v495 = vpack.c.b16 %v492, %v491
    %v496 = vpack.c.b16 %v494, %v493
    %v500 = vsel %vm71, %v475, 0
    %502 = vmatprep.subr.bf16.mxu0 0
    %503 = vmatpush1.bf16.msra.mxu0 %v495
    %504 = vmatprep.subr.bf16.mxu0 0
    %505 = vmatpush1.bf16.msra.mxu0 %v496
    %506 = vmatprep.subr.bf16.mxu0 0
    %507 = vmatpush1.bf16.msra.mxu0 0
    %508 = vmatprep.subr.bf16.mxu0 0
    %509 = vmatpush1.bf16.msra.mxu0 0
    %510 = vmatprep.subr.bf16.mxu0 0
    %511 = vmatpush1.bf16.msra.mxu0 0
    %512 = vmatprep.subr.bf16.mxu0 0
    %513 = vmatpush1.bf16.msra.mxu0 0
    %514 = vmatprep.subr.bf16.mxu0 0
    %515 = vmatpush1.bf16.msra.mxu0 0
    %516 = vmatprep.subr.bf16.mxu0 0
    %517 = vmatpush1.bf16.msra.mxu0 0
    %518 = vmatprep.subr.bf16.mxu0 0
    %519 = vmatpush1.bf16.msra.mxu0 0
    %520 = vmatprep.subr.bf16.mxu0 0
    %521 = vmatpush1.bf16.msra.mxu0 0
    %522 = vmatprep.subr.bf16.mxu0 0
    %523 = vmatpush1.bf16.msra.mxu0 0
    %524 = vmatprep.subr.bf16.mxu0 0
    %525 = vmatpush1.bf16.msra.mxu0 0
    %526 = vmatprep.subr.bf16.mxu0 0
    %527 = vmatpush1.bf16.msra.mxu0 0
    %528 = vmatprep.subr.bf16.mxu0 0
    %529 = vmatpush1.bf16.msra.mxu0 0
    %530 = vmatprep.subr.bf16.mxu0 0
    %531 = vmatpush1.bf16.msra.mxu0 0
    %532 = vmatprep.subr.bf16.mxu0 0
    %533 = vmatpush1.bf16.msra.mxu0 0
    %534 = vmatprep.mubr.bf16.mxu0 0
    %535 = vmatmul.mubr.bf16.gmra.mrb[0].mxu0 %v500
    %v536 = vpop.f32.mrb[0].mxu0
    %v537 = vadd.f32 %v485, %v536
    %v538 = vpop.f32.mrb[0].mxu0
    %v539 = vpop.f32.mrb[0].mxu0
    %v540 = vadd.f32 %v485, %v539
    %v541 = vpop.f32.mrb[0].mxu0
    %542 = vdwg.mxu0
    %v543 = vmul.f32 %v537, %v537
    %v544 = vmul.f32 %v540, %v540
    %v545 = vmul.f32 %v537, %v543
    %v546 = vmul.f32 %v540, %v544
    %v547 = vmul.f32 %v545, 0.044715
    %v548 = vmul.f32 %v546, 0.044715
    %v549 = vadd.f32 %v537, %v547
    %v550 = vadd.f32 %v540, %v548
    %v551 = vmul.f32 %v549, 0.7978846
    %v552 = vmul.f32 %v550, 0.7978846
    %v553 = vtanh.pop %v551
    %v554 = vtanh.pop %v552
    %v555 = vadd.f32 %v553, 1.0
    %v556 = vadd.f32 %v554, 1.0
    %v557 = vmul.f32 %v555, 0.5
    %v558 = vmul.f32 %v556, 0.5
    %v559 = vmul.f32 %v537, %v557
    %v560 = vmul.f32 %v540, %v558
    %v561 = vpack.c.bf16 %v560, %v559
    %v562 = vld [vmem:[%s9] sm:$0xf]
    %v563 = vld [vmem:[%s9 + $0x4] sm:$0xf]
    %v564 = vld [vmem:[%s9 + $0x8] sm:$0xf]
    %v565 = vld [vmem:[%s9 + $0xc] sm:$0xf]
    %v566 = vld [vmem:[%s9 + $0x10] sm:$0xf]
    %v567 = vld [vmem:[%s9 + $0x14] sm:$0xf]
    %v568 = vld [vmem:[%s9 + $0x18] sm:$0xf]
    %v569 = vld [vmem:[%s9 + $0x1c] sm:$0xf]
    %v570 = vld [vmem:[%s9 + $0x20] sm:$0xf]
    %v571 = vld [vmem:[%s9 + $0x24] sm:$0xf]
    %v572 = vld [vmem:[%s9 + $0x28] sm:$0xf]
    %v573 = vld [vmem:[%s9 + $0x2c] sm:$0xf]
    %v574 = vld [vmem:[%s9 + $0x30] sm:$0xf]
    %v575 = vld [vmem:[%s9 + $0x34] sm:$0xf]
    %v576 = vld [vmem:[%s9 + $0x38] sm:$0xf]
    %v577 = vld [vmem:[%s9 + $0x3c] sm:$0xf]
    %v594 = vunpack.c.l.b16 %v562
    %v595 = vunpack.c.l.b16 %v563
    %v596 = vunpack.c.l.b16 %v564
    %v597 = vunpack.c.l.b16 %v565
    %v598 = vunpack.c.l.b16 %v566
    %v599 = vunpack.c.l.b16 %v567
    %v600 = vunpack.c.l.b16 %v568
    %v601 = vunpack.c.l.b16 %v569
    %v602 = vunpack.c.l.b16 %v570
    %v603 = vunpack.c.l.b16 %v571
    %v604 = vunpack.c.l.b16 %v572
    %v605 = vunpack.c.l.b16 %v573
    %v606 = vunpack.c.l.b16 %v574
    %v607 = vunpack.c.l.b16 %v575
    %v608 = vunpack.c.l.b16 %v576
    %v609 = vunpack.c.l.b16 %v577
    %v610 = vpack.c.b16 %v595, %v594
    %v611 = vpack.c.b16 %v597, %v596
    %v612 = vpack.c.b16 %v599, %v598
    %v613 = vpack.c.b16 %v601, %v600
    %v614 = vpack.c.b16 %v603, %v602
    %v615 = vpack.c.b16 %v605, %v604
    %v616 = vpack.c.b16 %v607, %v606
    %v617 = vpack.c.b16 %v609, %v608
    %626 = vmatprep.subr.bf16.mxu0 0
    %627 = vmatpush1.bf16.msra.mxu0 %v610
    %628 = vmatprep.subr.bf16.mxu0 0
    %629 = vmatpush1.bf16.msra.mxu0 %v611
    %630 = vmatprep.subr.bf16.mxu0 0
    %631 = vmatpush1.bf16.msra.mxu0 %v612
    %632 = vmatprep.subr.bf16.mxu0 0
    %633 = vmatpush1.bf16.msra.mxu0 %v613
    %634 = vmatprep.subr.bf16.mxu0 0
    %635 = vmatpush1.bf16.msra.mxu0 %v614
    %636 = vmatprep.subr.bf16.mxu0 0
    %637 = vmatpush1.bf16.msra.mxu0 %v615
    %638 = vmatprep.subr.bf16.mxu0 0
    %639 = vmatpush1.bf16.msra.mxu0 %v616
    %640 = vmatprep.subr.bf16.mxu0 0
    %641 = vmatpush1.bf16.msra.mxu0 %v617
    %642 = vmatprep.subr.bf16.mxu0 0
    %643 = vmatpush1.bf16.msra.mxu0 0
    %644 = vmatprep.subr.bf16.mxu0 0
    %645 = vmatpush1.bf16.msra.mxu0 0
    %646 = vmatprep.subr.bf16.mxu0 0
    %647 = vmatpush1.bf16.msra.mxu0 0
    %648 = vmatprep.subr.bf16.mxu0 0
    %649 = vmatpush1.bf16.msra.mxu0 0
    %650 = vmatprep.subr.bf16.mxu0 0
    %651 = vmatpush1.bf16.msra.mxu0 0
    %652 = vmatprep.subr.bf16.mxu0 0
    %653 = vmatpush1.bf16.msra.mxu0 0
    %654 = vmatprep.subr.bf16.mxu0 0
    %655 = vmatpush1.bf16.msra.mxu0 0
    %656 = vmatprep.subr.bf16.mxu0 0
    %657 = vmatpush1.bf16.msra.mxu0 0
    %658 = vmatprep.mubr.bf16.mxu0 0
    %659 = vmatmul.mubr.bf16.gmra.mrb[0].mxu0 %v561
    %v660 = vpop.f32.mrb[0].mxu0
    %v661 = vadd.f32 0.0, %v660
    %v662 = vpop.f32.mrb[0].mxu0
    %v663 = vpop.f32.mrb[0].mxu0
    %v664 = vadd.f32 0.0, %v663
    %v665 = vpop.f32.mrb[0].mxu0
    %666 = vdwg.mxu0
    %v667 = vadd.f32 %v473, %v661
    %v668 = vadd.f32 %v474, %v664
    %v669 = vld [vmem:[%s10] sm:$0x1]
    %v671 = vlaneseq
    %v672 = vshrl.u32 %v671, 7
    %v673 = vsub.s32 0, %v672
    %v674 = vrot.slane %v669, %v673
    %v676 = vadd.f32 %v667, %v674
    %v677 = vadd.f32 %v668, %v674
    %v678 = vld [vmem:[%s11] sm:$0x1]
    %v679 = vld [vmem:[%s12] sm:$0x1]
    %v680 = vsel %vm71, %v676, 0.0
    %681 = vadd.xlane.f32.xlu0 %v680
    %v682 = vpop.xlane.xlu0 %681
    %v683 = vsel %vm71, %v677, 0.0
    %684 = vadd.xlane.f32.xlu0 %v683
    %v685 = vpop.xlane.xlu0 %684
    %v686 = vmul.f32 %v676, %v676
    %v687 = vmul.f32 %v677, %v677
    %v688 = vsel %vm71, %v686, 0.0
    %689 = vadd.xlane.f32.xlu0 %v688
    %v690 = vpop.xlane.xlu0 %689
    %v691 = vsel %vm71, %v687, 0.0
    %692 = vadd.xlane.f32.xlu0 %v691
    %v693 = vpop.xlane.xlu0 %692
    %v694 = vmul.f32 %v682, 0.03125
    %v695 = vmul.f32 %v685, 0.03125
    %v696 = vmul.f32 %v690, 0.03125
    %v697 = vmul.f32 %v693, 0.03125
    %v698 = vmul.f32 %v694, %v694
    %v699 = vmul.f32 %v695, %v695
    %v700 = vsub.f32 %v696, %v698
    %v701 = vsub.f32 %v697, %v699
    %v702 = vsub.f32 %v676, %v694
    %v703 = vsub.f32 %v677, %v695
    %v704 = vadd.f32 %v700, 1e-12
    %v705 = vadd.f32 %v701, 1e-12
    %v706 = vrsqrt.pop %v704
    %v707 = vrsqrt.pop %v705
    %v708 = vmul.f32 %v702, %v706
    %v709 = vmul.f32 %v703, %v707
    %v711 = vlaneseq
    %v712 = vshrl.u32 %v711, 7
    %v713 = vsub.s32 0, %v712
    %v714 = vrot.slane %v678, %v713
    %v716 = vmul.f32 %v708, %v714
    %v717 = vmul.f32 %v709, %v714
    %v719 = vlaneseq
    %v720 = vshrl.u32 %v719, 7
    %v721 = vsub.s32 0, %v720
    %v722 = vrot.slane %v679, %v721
    %v724 = vadd.f32 %v716, %v722
    %v725 = vadd.f32 %v717, %v722
    %v726 = vld [vmem:[%s2] sm:$0x1]
    %v728 = vsel %vm173, %v726, 0
    %730 = vmatprep.subr.mxu0 0.0
    %731 = vmatpush1.msra.mxu0 %v724
    %732 = vmatprep.subr.mxu0 0.0
    %733 = vmatpush1.msra.mxu0 0.0
    %734 = vmatprep.subr.mxu0 0.0
    %735 = vmatpush1.msra.mxu0 0.0
    %736 = vmatprep.subr.mxu0 0.0
    %737 = vmatpush1.msra.mxu0 0.0
    %738 = vmatprep.subr.mxu0 0.0
    %739 = vmatpush1.msra.mxu0 0.0
    %740 = vmatprep.subr.mxu0 0.0
    %741 = vmatpush1.msra.mxu0 0.0
    %742 = vmatprep.subr.mxu0 0.0
    %743 = vmatpush1.msra.mxu0 0.0
    %744 = vmatprep.subr.mxu0 0.0
    %745 = vmatpush1.msra.mxu0 0.0
    %746 = vmatprep.subr.mxu0 0.0
    %747 = vmatpush1.msra.mxu0 0.0
    %748 = vmatprep.subr.mxu0 0.0
    %749 = vmatpush1.msra.mxu0 0.0
    %750 = vmatprep.subr.mxu0 0.0
    %751 = vmatpush1.msra.mxu0 0.0
    %752 = vmatprep.subr.mxu0 0.0
    %753 = vmatpush1.msra.mxu0 0.0
    %754 = vmatprep.subr.mxu0 0.0
    %755 = vmatpush1.msra.mxu0 0.0
    %756 = vmatprep.subr.mxu0 0.0
    %757 = vmatpush1.msra.mxu0 0.0
    %758 = vmatprep.subr.mxu0 0.0
    %759 = vmatpush1.msra.mxu0 0.0
    %760 = vmatprep.subr.mxu0 0.0
    %761 = vmatpush1.msra.mxu0 0.0
    %762 = vmatprep.subr.mxu0 0.0
    %763 = vmatpush1.msra.mxu0 0.0
    %764 = vmatprep.subr.mxu0 0.0
    %765 = vmatpush1.msra.mxu0 0.0
    %766 = vmatprep.subr.mxu0 0.0
    %767 = vmatpush1.msra.mxu0 0.0
    %768 = vmatprep.subr.mxu0 0.0
    %769 = vmatpush1.msra.mxu0 0.0
    %770 = vmatprep.subr.mxu0 0.0
    %771 = vmatpush1.msra.mxu0 0.0
    %772 = vmatprep.subr.mxu0 0.0
    %773 = vmatpush1.msra.mxu0 0.0
    %774 = vmatprep.subr.mxu0 0.0
    %775 = vmatpush1.msra.mxu0 0.0
    %776 = vmatprep.subr.mxu0 0.0
    %777 = vmatpush1.msra.mxu0 0.0
    %778 = vmatprep.subr.mxu0 0.0
    %779 = vmatpush1.msra.mxu0 0.0
    %780 = vmatprep.subr.mxu0 0.0
    %781 = vmatpush1.msra.mxu0 0.0
    %782 = vmatprep.subr.mxu0 0.0
    %783 = vmatpush1.msra.mxu0 0.0
    %784 = vmatprep.subr.mxu0 0.0
    %785 = vmatpush1.msra.mxu0 0.0
    %786 = vmatprep.subr.mxu0 0.0
    %787 = vmatpush1.msra.mxu0 0.0
    %788 = vmatprep.subr.mxu0 0.0
    %789 = vmatpush1.msra.mxu0 0.0
    %790 = vmatprep.subr.mxu0 0.0
    %791 = vmatpush1.msra.mxu0 0.0
    %792 = vmatprep.subr.mxu0 0.0
    %793 = vmatpush1.msra.mxu0 0.0
    %794 = vmatprep.mubr.f32.mxu0 0.0
    %795 = vmatmul.mubr.f32.gmra.mrb[0].mxu0 %v728
    %v796 = vpop.f32.mrb[0].mxu0
    %v797 = vadd.f32 0.0, %v796
    %v798 = vpop.f32.mrb[0].mxu0
    %799 = vdwg.mxu0
    %vm800 = vcmask 253952
    %801 = vst.msk [vmem:[#allocation2] sm:$0x1] %vm800, %v797
    %s802 = scalar_lea.vmem %s2, 1
    %v803 = vld [vmem:[%s802] sm:$0x1]
    %v805 = vsel %vm173, %v803, 0
    %807 = vmatprep.subr.mxu0 0.0
    %808 = vmatpush1.msra.mxu0 %v725
    %809 = vmatprep.subr.mxu0 0.0
    %810 = vmatpush1.msra.mxu0 0.0
    %811 = vmatprep.subr.mxu0 0.0
    %812 = vmatpush1.msra.mxu0 0.0
    %813 = vmatprep.subr.mxu0 0.0
    %814 = vmatpush1.msra.mxu0 0.0
    %815 = vmatprep.subr.mxu0 0.0
    %816 = vmatpush1.msra.mxu0 0.0
    %817 = vmatprep.subr.mxu0 0.0
    %818 = vmatpush1.msra.mxu0 0.0
    %819 = vmatprep.subr.mxu0 0.0
    %820 = vmatpush1.msra.mxu0 0.0
    %821 = vmatprep.subr.mxu0 0.0
    %822 = vmatpush1.msra.mxu0 0.0
    %823 = vmatprep.subr.mxu0 0.0
    %824 = vmatpush1.msra.mxu0 0.0
    %825 = vmatprep.subr.mxu0 0.0
    %826 = vmatpush1.msra.mxu0 0.0
    %827 = vmatprep.subr.mxu0 0.0
    %828 = vmatpush1.msra.mxu0 0.0
    %829 = vmatprep.subr.mxu0 0.0
    %830 = vmatpush1.msra.mxu0 0.0
    %831 = vmatprep.subr.mxu0 0.0
    %832 = vmatpush1.msra.mxu0 0.0
    %833 = vmatprep.subr.mxu0 0.0
    %834 = vmatpush1.msra.mxu0 0.0
    %835 = vmatprep.subr.mxu0 0.0
    %836 = vmatpush1.msra.mxu0 0.0
    %837 = vmatprep.subr.mxu0 0.0
    %838 = vmatpush1.msra.mxu0 0.0
    %839 = vmatprep.subr.mxu0 0.0
    %840 = vmatpush1.msra.mxu0 0.0
    %841 = vmatprep.subr.mxu0 0.0
    %842 = vmatpush1.msra.mxu0 0.0
    %843 = vmatprep.subr.mxu0 0.0
    %844 = vmatpush1.msra.mxu0 0.0
    %845 = vmatprep.subr.mxu0 0.0
    %846 = vmatpush1.msra.mxu0 0.0
    %847 = vmatprep.subr.mxu0 0.0
    %848 = vmatpush1.msra.mxu0 0.0
    %849 = vmatprep.subr.mxu0 0.0
    %850 = vmatpush1.msra.mxu0 0.0
    %851 = vmatprep.subr.mxu0 0.0
    %852 = vmatpush1.msra.mxu0 0.0
    %853 = vmatprep.subr.mxu0 0.0
    %854 = vmatpush1.msra.mxu0 0.0
    %855 = vmatprep.subr.mxu0 0.0
    %856 = vmatpush1.msra.mxu0 0.0
    %857 = vmatprep.subr.mxu0 0.0
    %858 = vmatpush1.msra.mxu0 0.0
    %859 = vmatprep.subr.mxu0 0.0
    %860 = vmatpush1.msra.mxu0 0.0
    %861 = vmatprep.subr.mxu0 0.0
    %862 = vmatpush1.msra.mxu0 0.0
    %863 = vmatprep.subr.mxu0 0.0
    %864 = vmatpush1.msra.mxu0 0.0
    %865 = vmatprep.subr.mxu0 0.0
    %866 = vmatpush1.msra.mxu0 0.0
    %867 = vmatprep.subr.mxu0 0.0
    %868 = vmatpush1.msra.mxu0 0.0
    %869 = vmatprep.subr.mxu0 0.0
    %870 = vmatpush1.msra.mxu0 0.0
    %871 = vmatprep.mubr.f32.mxu0 0.0
    %872 = vmatmul.mubr.f32.gmra.mrb[0].mxu0 %v805
    %v873 = vpop.f32.mrb[0].mxu0
    %v874 = vadd.f32 0.0, %v873
    %v875 = vpop.f32.mrb[0].mxu0
    %876 = vdwg.mxu0
    %s877 = scalar_lea.vmem [#allocation2], 1
    %878 = vst.msk [vmem:[%s877] sm:$0x1] %vm800, %v874
    // Predicated region
    $region54: #{tpu_custom_call.1} parent=1 // pred_check
      _
    $region55: #{tpu_custom_call.1} parent=1 // pred_check_branch
      %880 = sbr.rel (0) target = $region57
    $region56: #{tpu_custom_call.1} parent=1 // pred_region
      %s882 = ssub.s32 32, 32
      %883 = vsyncadd [#allocation3], %s882
      %s884 = sshll.u32 [#allocation2], 4
      %s885 = int_to_ptr.vmem [resolvable:$true] %s884
      %890 = dma.vmem_to_hbm [thread:$0]  %s885, 32, %s13, [#allocation3], 16, 16, 1
    $region57: #{tpu_custom_call.1} parent=1 // pred_fallthru
      _
    // Predicated region
    $region58: #{tpu_custom_call.1} parent=1 // pred_check
      _
    $region59: #{tpu_custom_call.1} parent=1 // pred_check_branch
      %892 = sbr.rel (0) target = $region61
    $region60: #{tpu_custom_call.1} parent=1 // pred_region
      %893 = dma.done [#allocation3], 32
    $region61: #{tpu_custom_call.1} parent=1 // pred_fallthru
      _
    %894 = vsyncpa [#allocation3], 1

</llo_original>
